<compile_context>
chip_gen: v7x
topology: tpu7x:2x2x1
jax: 0.10.0
libtpu: 0.0.40
codegen_flags: <defaults>
</compile_context>

<pallas_src>
import functools

import jax
import jax.numpy as jnp
from jax.experimental import pallas as pl
from jax.experimental.pallas import tpu as pltpu

_LANES = 128


def _cdiv(a, b):
    return (a + b - 1) // b


def _round_up(a, b):
    return _cdiv(a, b) * b


def _make_soft_iou_kernel(D, tile_r, tiles_per_split, coverage_rows):
    """Build the kernel body with all tiling constants baked in statically."""
    full_rows = D // _LANES        # rows whose 128 lanes are all valid
    rem_lanes = D % _LANES         # valid lanes in the single ragged row (if any)
    has_tail = coverage_rows > full_rows   # does any tile need masking at all?

    def kernel(x_ref, t_ref, inter_ref, psum_ref, tsum_ref):
        s = pl.program_id(0)       # reduction split (TensorCore shard on v7x)
        r = pl.program_id(2)       # row tile within this split

        @pl.when(r == 0)
        def _init():
            inter_ref[...] = jnp.zeros_like(inter_ref)
            psum_ref[...] = jnp.zeros_like(psum_ref)
            tsum_ref[...] = jnp.zeros_like(tsum_ref)

        # f32 compute regardless of input dtype: bf16 logits / int8 / bool
        # masks stay narrow in HBM and are upcast per-tile in VMEM.
        pred = jax.nn.sigmoid(x_ref[...].astype(jnp.float32))   # (tile_r, 128)
        tf = t_ref[...].astype(jnp.float32)

        def accum(p, t):
            # Per-lane partial sums only (no cross-lane reduce in the hot
            # loop); union is rebuilt in the epilogue as sum(p)+sum(t)-inter.
            inter_ref[...] += jnp.sum(p * t, axis=0, keepdims=True)
            psum_ref[...] += jnp.sum(p, axis=0, keepdims=True)
            tsum_ref[...] += jnp.sum(t, axis=0, keepdims=True)

        if not has_tail:
            accum(pred, tf)
        else:
            # Logical start row of this tile (the DMA block index is clamped
            # in the BlockSpec; this mask is what guarantees correctness).
            row_start = (s * tiles_per_split + r) * tile_r
            needs_mask = row_start + tile_r > full_rows

            @pl.when(jnp.logical_not(needs_mask))
            def _hot():
                accum(pred, tf)

            @pl.when(needs_mask)
            def _tail():
                row_ids = row_start + jax.lax.broadcasted_iota(
                    jnp.int32, (tile_r, _LANES), 0)
                mask = row_ids < full_rows
                if rem_lanes:
                    col_ids = jax.lax.broadcasted_iota(
                        jnp.int32, (tile_r, _LANES), 1)
                    mask = mask | ((row_ids == full_rows) & (col_ids < rem_lanes))
                # where/select (not multiply-by-mask) so garbage / NaN from the
                # clamped boundary DMA cannot leak into the sums.
                accum(jnp.where(mask, pred, 0.0), jnp.where(mask, tf, 0.0))

    return kernel


@functools.partial(jax.jit, static_argnames=("max_tile_rows",))
def soft_iou_loss(inputs, target, *, max_tile_rows=4096):
    """SoftIoU loss, identical to the PyTorch forward.

    inputs: (N, ...) float logits (f32 or bf16 — bf16 halves HBM traffic).
    target: (N, ...) mask in any dtype (bool / int8 / int / float); it is
        passed to the kernel in its native narrow dtype (no wrapper cast).
    """
    N = inputs.shape[0]
    D = 1
    for s in inputs.shape[1:]:
        D *= s

    rows = _cdiv(D, _LANES)

    x2 = inputs.reshape(N, D)
    t2 = target.reshape(N, D)
    d_pad = rows * _LANES - D
    if d_pad:
        # TODO(synk): only the lane-ragged case (D % 128 != 0) still pays one
        # padded copy — the free (N, rows, 128) reshape requires it.  The
        # kernel masks these elements, so the pad value is irrelevant.
        x2 = jnp.pad(x2, ((0, 0), (0, d_pad)))
        t2 = jnp.pad(t2, ((0, 0), (0, d_pad)))
    x3 = x2.reshape(N, rows, _LANES)
    t3 = t2.reshape(N, rows, _LANES)

    # ---- tiling -------------------------------------------------------------
    # Split the row reduction in two so that on v7x both TensorCores get work
    # even when N == 1 (harmless extra parallel axis on v5e/v6e).  tile_r is a
    # multiple of 32 so 1-byte targets keep a legal sublane tiling; tiny
    # inputs use a single full-extent tile instead.
    if rows < 64:
        n_split, tiles_per_split, tile_r = 1, 1, rows
    else:
        n_split = 2
        max_rows = max(32, _round_up(max_tile_rows, 32))
        split_rows = _cdiv(rows, n_split)
        tiles_per_split = _cdiv(split_rows, max_rows)
        tile_r = _round_up(_cdiv(split_rows, tiles_per_split), 32)
        tiles_per_split = _cdiv(_cdiv(rows, tile_r), n_split)

    coverage_rows = n_split * tiles_per_split * tile_r
    max_block = _cdiv(rows, tile_r) - 1   # last block index that stays in-bounds

    def in_map(s, n, r):
        # Clamp so a (rare) fully-out-of-range logical tile re-reads the last
        # valid block instead of issuing an out-of-bounds DMA; the in-kernel
        # mask zeroes its contribution.
        return (n, jnp.minimum(s * tiles_per_split + r, max_block), 0)

    def out_map(s, n, r):
        return (s, n, 0, 0)

    # ---- VMEM budget: double-buffered inputs + in-kernel f32 temporaries ----
    tile_elems = tile_r * _LANES
    x_bytes = jnp.dtype(x3.dtype).itemsize
    t_bytes = jnp.dtype(t3.dtype).itemsize
    f32_tile = tile_elems * 4
    vmem_limit = 2 * tile_elems * (x_bytes + t_bytes) + 8 * f32_tile + (4 << 20)
    vmem_limit = int(min(max(vmem_limit, 16 << 20), 48 << 20))  # fits v7x 64 MiB

    kernel = _make_soft_iou_kernel(D, tile_r, tiles_per_split, coverage_rows)

    inter_p, psum_p, tsum_p = pl.pallas_call(
        kernel,
        out_shape=(
            jax.ShapeDtypeStruct((n_split, N, 1, _LANES), jnp.float32),
            jax.ShapeDtypeStruct((n_split, N, 1, _LANES), jnp.float32),
            jax.ShapeDtypeStruct((n_split, N, 1, _LANES), jnp.float32),
        ),
        grid_spec=pltpu.PrefetchScalarGridSpec(
            num_scalar_prefetch=0,
            grid=(n_split, N, tiles_per_split),
            in_specs=[
                pl.BlockSpec((None, tile_r, _LANES), in_map),
                pl.BlockSpec((None, tile_r, _LANES), in_map),
            ],
            out_specs=[
                pl.BlockSpec((None, None, 1, _LANES), out_map),
                pl.BlockSpec((None, None, 1, _LANES), out_map),
                pl.BlockSpec((None, None, 1, _LANES), out_map),
            ],
        ),
        compiler_params=pltpu.CompilerParams(
            dimension_semantics=("parallel", "parallel", "arbitrary"),
            vmem_limit_bytes=vmem_limit,
        ),
    )(x3, t3)

    # ---- tiny scalar epilogue in plain XLA (free) ----------------------------
    inter = inter_p.sum(axis=(0, 2, 3))                         # (N,)
    union = psum_p.sum(axis=(0, 2, 3)) + tsum_p.sum(axis=(0, 2, 3)) - inter
    iou = inter / (union + 1e-16)
    return (1.0 - jnp.mean(iou)).astype(jnp.float32)


def soft_iou_loss_ref(inputs, target):
    """Pure-JAX reference mirroring the PyTorch forward exactly."""
    N = inputs.shape[0]
    pred = jax.nn.sigmoid(inputs.astype(jnp.float32))
    target = target.astype(jnp.float32)
    inter = (pred * target).reshape(N, -1).sum(1)
    union = (pred + target - pred * target).reshape(N, -1).sum(1)
    iou = inter / (union + 1e-16)
    return 1.0 - iou.mean()


if __name__ == "__main__":
    key = jax.random.PRNGKey(0)
    k1, k2, k3, k4, k5, k6 = jax.random.split(key, 6)

    # (a) canonical small shape: N=2, n_classes=4, 16x16 spatial (D % 128 == 0,
    #     single full-extent tile, no masking)
    xa = jax.random.normal(k1, (2, 4, 16, 16), dtype=jnp.float32)
    ta = (jax.random.uniform(k2, (2, 4, 16, 16)) > 0.5).astype(jnp.int8)

    # (b) larger spatial so the reduction is split across the 2-way parallel
    #     axis and the second half's tile is row-masked in-kernel
    xb = jax.random.normal(k3, (2, 4, 48, 48), dtype=jnp.float32)
    tb = (jax.random.uniform(k4, (2, 4, 48, 48)) > 0.5).astype(jnp.int8)

    # (c) lane-ragged flattened size (D % 128 != 0) exercises the lane mask
    xc = jax.random.normal(k5, (2, 3, 20, 20), dtype=jnp.float32)
    tc = (jax.random.uniform(k6, (2, 3, 20, 20)) > 0.5).astype(jnp.int8)

    for x, t in ((xa, ta), (xb, tb), (xc, tc)):
        loss = soft_iou_loss(x, t)
        jax.block_until_ready(loss)
        ref = soft_iou_loss_ref(x, t)
        assert jnp.allclose(loss, ref, atol=1e-5, rtol=1e-5), (x.shape, loss, ref)

    print("KERNEL_OK")
</pallas_src>

<mosaic_0001>
module attributes {stable_mosaic.version = 11 : i64} {
  func.func @kernel(%arg0: i32, %arg1: i32, %arg2: i32, %arg3: memref<1x8x128xf32, #tpu.memory_space<vmem>>, %arg4: memref<1x8x128xi8, #tpu.memory_space<vmem>>, %arg5: memref<1x1x1x128xf32, #tpu.memory_space<vmem>>, %arg6: memref<1x1x1x128xf32, #tpu.memory_space<vmem>>, %arg7: memref<1x1x1x128xf32, #tpu.memory_space<vmem>>) attributes {dimension_semantics = [#tpu.dimension_semantics<parallel>, #tpu.dimension_semantics<parallel>, #tpu.dimension_semantics<arbitrary>], iteration_bounds = array<i64: 1, 2, 1>, scalar_prefetch = 0 : i64, scratch_operands = 0 : i64, tpu.core_type = #tpu.core_type<tc>, window_params = [{transform_indices = @transform_0, window_bounds = array<i64: 1, 8, 128>}, {transform_indices = @transform_1, window_bounds = array<i64: 1, 8, 128>}, {transform_indices = @transform_2, window_bounds = array<i64: 1, 1, 1, 128>}, {transform_indices = @transform_3, window_bounds = array<i64: 1, 1, 1, 128>}, {transform_indices = @transform_4, window_bounds = array<i64: 1, 1, 1, 128>}]} {
    %c0_i32 = arith.constant 0 : i32
    %0 = arith.cmpi eq, %arg2, %c0_i32 : i32
    %1 = arith.extui %0 : i1 to i32
    %c0_i32_0 = arith.constant 0 : i32
    %2 = arith.cmpi ne, %1, %c0_i32_0 : i32
    scf.if %2 {
      %cst_33 = arith.constant 0.000000e+00 : f32
      %38 = vector.broadcast %cst_33 : f32 to vector<1x128xf32>
      %c0_34 = arith.constant 0 : index
      %c0_35 = arith.constant 0 : index
      %c0_36 = arith.constant 0 : index
      %c0_37 = arith.constant 0 : index
      %39 = vector.load %arg5[%c0_34, %c0_35, %c0_36, %c0_37] : memref<1x1x1x128xf32, #tpu.memory_space<vmem>>, vector<1x1x1x128xf32>
      %40 = vector.shape_cast %39 : vector<1x1x1x128xf32> to vector<1x128xf32>
      %41 = vector.shape_cast %38 : vector<1x128xf32> to vector<1x1x1x128xf32>
      tpu.vector_store %arg5[%c0_34, %c0_35, %c0_36, %c0_37], %41 {strides = array<i32>} : memref<1x1x1x128xf32, #tpu.memory_space<vmem>>, vector<1x1x1x128xf32>,
      %cst_38 = arith.constant 0.000000e+00 : f32
      %42 = vector.broadcast %cst_38 : f32 to vector<1x128xf32>
      %c0_39 = arith.constant 0 : index
      %c0_40 = arith.constant 0 : index
      %c0_41 = arith.constant 0 : index
      %c0_42 = arith.constant 0 : index
      %43 = vector.load %arg6[%c0_39, %c0_40, %c0_41, %c0_42] : memref<1x1x1x128xf32, #tpu.memory_space<vmem>>, vector<1x1x1x128xf32>
      %44 = vector.shape_cast %43 : vector<1x1x1x128xf32> to vector<1x128xf32>
      %45 = vector.shape_cast %42 : vector<1x128xf32> to vector<1x1x1x128xf32>
      tpu.vector_store %arg6[%c0_39, %c0_40, %c0_41, %c0_42], %45 {strides = array<i32>} : memref<1x1x1x128xf32, #tpu.memory_space<vmem>>, vector<1x1x1x128xf32>,
      %cst_43 = arith.constant 0.000000e+00 : f32
      %46 = vector.broadcast %cst_43 : f32 to vector<1x128xf32>
      %c0_44 = arith.constant 0 : index
      %c0_45 = arith.constant 0 : index
      %c0_46 = arith.constant 0 : index
      %c0_47 = arith.constant 0 : index
      %47 = vector.load %arg7[%c0_44, %c0_45, %c0_46, %c0_47] : memref<1x1x1x128xf32, #tpu.memory_space<vmem>>, vector<1x1x1x128xf32>
      %48 = vector.shape_cast %47 : vector<1x1x1x128xf32> to vector<1x128xf32>
      %49 = vector.shape_cast %46 : vector<1x128xf32> to vector<1x1x1x128xf32>
      tpu.vector_store %arg7[%c0_44, %c0_45, %c0_46, %c0_47], %49 {strides = array<i32>} : memref<1x1x1x128xf32, #tpu.memory_space<vmem>>, vector<1x1x1x128xf32>,
    } else {
    }
    %c0 = arith.constant 0 : index
    %c0_1 = arith.constant 0 : index
    %c0_2 = arith.constant 0 : index
    %3 = vector.load %arg3[%c0, %c0_1, %c0_2] : memref<1x8x128xf32, #tpu.memory_space<vmem>>, vector<1x8x128xf32>
    %4 = vector.shape_cast %3 : vector<1x8x128xf32> to vector<8x128xf32>
    %5 = arith.negf %4 : vector<8x128xf32>
    %6 = math.exp %5 : vector<8x128xf32>
    %cst = arith.constant 1.000000e+00 : f32
    %7 = vector.broadcast %cst : f32 to vector<8x128xf32>
    %8 = arith.addf %7, %6 : vector<8x128xf32>
    %9 = arith.divf %7, %8 : vector<8x128xf32>
    %c0_3 = arith.constant 0 : index
    %c0_4 = arith.constant 0 : index
    %c0_5 = arith.constant 0 : index
    %10 = vector.load %arg4[%c0_3, %c0_4, %c0_5] : memref<1x8x128xi8, #tpu.memory_space<vmem>>, vector<1x8x128xi8>
    %11 = vector.shape_cast %10 : vector<1x8x128xi8> to vector<8x128xi8>
    %12 = arith.sitofp %11 : vector<8x128xi8> to vector<8x128xf32>
    %c0_6 = arith.constant 0 : index
    %c0_7 = arith.constant 0 : index
    %c0_8 = arith.constant 0 : index
    %c0_9 = arith.constant 0 : index
    %13 = vector.load %arg5[%c0_6, %c0_7, %c0_8, %c0_9] : memref<1x1x1x128xf32, #tpu.memory_space<vmem>>, vector<1x1x1x128xf32>
    %14 = vector.shape_cast %13 : vector<1x1x1x128xf32> to vector<1x128xf32>
    %15 = arith.mulf %9, %12 : vector<8x128xf32>
    %cst_10 = arith.constant dense<0.000000e+00> : vector<128xf32>
    %16 = vector.multi_reduction <add>, %15, %cst_10 [0] : vector<8x128xf32> to vector<128xf32>
    %17 = vector.shape_cast %16 : vector<128xf32> to vector<1x128xf32>
    %18 = arith.addf %14, %17 : vector<1x128xf32>
    %c0_11 = arith.constant 0 : index
    %c0_12 = arith.constant 0 : index
    %c0_13 = arith.constant 0 : index
    %c0_14 = arith.constant 0 : index
    %19 = vector.load %arg5[%c0_11, %c0_12, %c0_13, %c0_14] : memref<1x1x1x128xf32, #tpu.memory_space<vmem>>, vector<1x1x1x128xf32>
    %20 = vector.shape_cast %19 : vector<1x1x1x128xf32> to vector<1x128xf32>
    %21 = vector.shape_cast %18 : vector<1x128xf32> to vector<1x1x1x128xf32>
    tpu.vector_store %arg5[%c0_11, %c0_12, %c0_13, %c0_14], %21 {strides = array<i32>} : memref<1x1x1x128xf32, #tpu.memory_space<vmem>>, vector<1x1x1x128xf32>,
    %c0_15 = arith.constant 0 : index
    %c0_16 = arith.constant 0 : index
    %c0_17 = arith.constant 0 : index
    %c0_18 = arith.constant 0 : index
    %22 = vector.load %arg6[%c0_15, %c0_16, %c0_17, %c0_18] : memref<1x1x1x128xf32, #tpu.memory_space<vmem>>, vector<1x1x1x128xf32>
    %23 = vector.shape_cast %22 : vector<1x1x1x128xf32> to vector<1x128xf32>
    %cst_19 = arith.constant dense<0.000000e+00> : vector<128xf32>
    %24 = vector.multi_reduction <add>, %9, %cst_19 [0] : vector<8x128xf32> to vector<128xf32>
    %25 = vector.shape_cast %24 : vector<128xf32> to vector<1x128xf32>
    %26 = arith.addf %23, %25 : vector<1x128xf32>
    %c0_20 = arith.constant 0 : index
    %c0_21 = arith.constant 0 : index
    %c0_22 = arith.constant 0 : index
    %c0_23 = arith.constant 0 : index
    %27 = vector.load %arg6[%c0_20, %c0_21, %c0_22, %c0_23] : memref<1x1x1x128xf32, #tpu.memory_space<vmem>>, vector<1x1x1x128xf32>
    %28 = vector.shape_cast %27 : vector<1x1x1x128xf32> to vector<1x128xf32>
    %29 = vector.shape_cast %26 : vector<1x128xf32> to vector<1x1x1x128xf32>
    tpu.vector_store %arg6[%c0_20, %c0_21, %c0_22, %c0_23], %29 {strides = array<i32>} : memref<1x1x1x128xf32, #tpu.memory_space<vmem>>, vector<1x1x1x128xf32>,
    %c0_24 = arith.constant 0 : index
    %c0_25 = arith.constant 0 : index
    %c0_26 = arith.constant 0 : index
    %c0_27 = arith.constant 0 : index
    %30 = vector.load %arg7[%c0_24, %c0_25, %c0_26, %c0_27] : memref<1x1x1x128xf32, #tpu.memory_space<vmem>>, vector<1x1x1x128xf32>
    %31 = vector.shape_cast %30 : vector<1x1x1x128xf32> to vector<1x128xf32>
    %cst_28 = arith.constant dense<0.000000e+00> : vector<128xf32>
    %32 = vector.multi_reduction <add>, %12, %cst_28 [0] : vector<8x128xf32> to vector<128xf32>
    %33 = vector.shape_cast %32 : vector<128xf32> to vector<1x128xf32>
    %34 = arith.addf %31, %33 : vector<1x128xf32>
    %c0_29 = arith.constant 0 : index
    %c0_30 = arith.constant 0 : index
    %c0_31 = arith.constant 0 : index
    %c0_32 = arith.constant 0 : index
    %35 = vector.load %arg7[%c0_29, %c0_30, %c0_31, %c0_32] : memref<1x1x1x128xf32, #tpu.memory_space<vmem>>, vector<1x1x1x128xf32>
    %36 = vector.shape_cast %35 : vector<1x1x1x128xf32> to vector<1x128xf32>
    %37 = vector.shape_cast %34 : vector<1x128xf32> to vector<1x1x1x128xf32>
    tpu.vector_store %arg7[%c0_29, %c0_30, %c0_31, %c0_32], %37 {strides = array<i32>} : memref<1x1x1x128xf32, #tpu.memory_space<vmem>>, vector<1x1x1x128xf32>,
    return
  }
  func.func @transform_0(%arg0: i32, %arg1: i32, %arg2: i32) -> (i32, i32, i32) {
    %c1_i32 = arith.constant 1 : i32
    %0 = arith.muli %arg0, %c1_i32 : i32
    %1 = arith.addi %0, %arg2 : i32
    %c0_i32 = arith.constant 0 : i32
    %2 = arith.minsi %1, %c0_i32 : i32
    %c0_i32_0 = arith.constant 0 : i32
    %c0_i32_1 = arith.constant 0 : i32
    return %arg1, %2, %c0_i32_0 : i32, i32, i32
  }
  func.func @transform_1(%arg0: i32, %arg1: i32, %arg2: i32) -> (i32, i32, i32) {
    %c1_i32 = arith.constant 1 : i32
    %0 = arith.muli %arg0, %c1_i32 : i32
    %1 = arith.addi %0, %arg2 : i32
    %c0_i32 = arith.constant 0 : i32
    %2 = arith.minsi %1, %c0_i32 : i32
    %c0_i32_0 = arith.constant 0 : i32
    %c0_i32_1 = arith.constant 0 : i32
    return %arg1, %2, %c0_i32_0 : i32, i32, i32
  }
  func.func @transform_2(%arg0: i32, %arg1: i32, %arg2: i32) -> (i32, i32, i32, i32) {
    %c0_i32 = arith.constant 0 : i32
    %c0_i32_0 = arith.constant 0 : i32
    %c0_i32_1 = arith.constant 0 : i32
    return %arg0, %arg1, %c0_i32, %c0_i32_0 : i32, i32, i32, i32
  }
  func.func @transform_3(%arg0: i32, %arg1: i32, %arg2: i32) -> (i32, i32, i32, i32) {
    %c0_i32 = arith.constant 0 : i32
    %c0_i32_0 = arith.constant 0 : i32
    %c0_i32_1 = arith.constant 0 : i32
    return %arg0, %arg1, %c0_i32, %c0_i32_0 : i32, i32, i32, i32
  }
  func.func @transform_4(%arg0: i32, %arg1: i32, %arg2: i32) -> (i32, i32, i32, i32) {
    %c0_i32 = arith.constant 0 : i32
    %c0_i32_0 = arith.constant 0 : i32
    %c0_i32_1 = arith.constant 0 : i32
    return %arg0, %arg1, %c0_i32, %c0_i32_0 : i32, i32, i32, i32
  }
}

</mosaic_0001>

<llo_original>
// kernel: soft_iou_loss.1
$region0: #{soft_iou_loss.1}
  #allocation0 [shape = 'u32[]', space=smem, size = 0x4, offset = 0x4, fixed_abs, tag = 'smem constant byte address 0x4 - core index']
  #allocation1 [shape = 'u32[144,128]{1,0:T(1,128)}', space=vmem, size = 0x12000, scoped, tag = 'internal scratch']
  %s0 = inlined_call_operand.vmem [shape: f32[2,8,128], index: 0, kind: input, shape index: {}]
  %s1 = inlined_call_operand.vmem [shape: s8[2,8,128], index: 1, kind: input, shape index: {}]
  %s2 = inlined_call_operand.vmem [shape: f32[1,2,1,128], index: 2, kind: output, shape index: {0}]
  %s3 = inlined_call_operand.vmem [shape: f32[1,2,1,128], index: 3, kind: output, shape index: {1}]
  %s4 = inlined_call_operand.vmem [shape: f32[1,2,1,128], index: 4, kind: output, shape index: {2}]
  %5 = xla_tuple %s2, %s3, %s4
  %s6 = sld [smem:[#allocation0]]
  $region61: #{soft_iou_loss.1} parent=0
    _
  %s8 = ssub.s32 1, %s6
  %s9 = scalar_select 0, %s8, %s6
  loop: start=0, step=1, limit=4
  $region2: #{soft_iou_loss.1} parent=0 // loop_pre_header
    _
  $region3: #{soft_iou_loss.1} parent=0 // loop_header
    %s11 = sphi 0, %s15
    %p12 = scmp.ge.s32.totalorder %s11, 4
    %s18 = sphi 0, %s37
    %s19 = sphi 0, %s33
    %s20 = sphi 0, %s29
    %s21 = sphi 0, %s18
    %s22 = sphi 0, %s19
    %s23 = sphi 0, %s20
    %s24 = sphi 0, %s21
    %s25 = sphi 0, %s22
    %s26 = sphi 0, %s23
    %s48 = sphi 0, %s50
    %s51 = sphi 0, %s48
    %s52 = sphi 0, %s51
    %s68 = sphi 0, %s52
    %s82 = sphi 0, %s84
    %s85 = sphi 0, %s82
    %s86 = sphi 0, %s85
    %s102 = sphi 0, %s86
    %s110 = sphi 0, %s112
    %s113 = sphi 0, %s110
    %s114 = sphi 0, %s113
    %s130 = sphi 0, %s114
    %s138 = sphi 0, %s140
    %s141 = sphi 0, %s138
    %s142 = sphi 0, %s141
    %s158 = sphi 0, %s142
    %s166 = sphi 0, %s168
    %s169 = sphi 0, %s166
    %s170 = sphi 0, %s169
    %s186 = sphi 0, %s170
  $region4: #{soft_iou_loss.1} parent=0 // loop_header_branch
    %14 = sbr.rel (%p12) target = $region8
  $region5: #{soft_iou_loss.1} parent=0 // loop_body
    %s16 = ssub.s32 %s11, 1
    %s17 = ssub.s32 %s11, 2
    %s27 = sadd.s32 1, %s20
    %p28 = scmp.ge.s32.totalorder %s27, 1
    %s29 = scalar_select %p28, 0, %s27
    %s30 = sadd.s32 1, %s19
    %s31 = scalar_select %p28, %s30, %s19
    %p32 = scmp.ge.s32.totalorder %s31, 2
    %s33 = scalar_select %p32, 0, %s31
    %s34 = sadd.s32 1, %s18
    %s35 = scalar_select %p32, %s34, %s18
    %p36 = scmp.ge.s32.totalorder %s35, 1
    %s37 = scalar_select %p36, 0, %s35
    %s38 = sadd.s32 %s18, %s20
    %p39 = scmp.lt.s32.totalorder %s38, 0
    %s40 = scalar_select %p39, %s38, 0
    %s41 = sadd.s32 %s37, %s29
    %p42 = scmp.lt.s32.totalorder %s41, 0
    %s43 = scalar_select %p42, %s41, 0
    %s44 = ssub.s32 %s19, %s33
    %s45 = ssub.s32 %s40, %s43
    %s46 = sor.u32 %s44, %s45
    %p47 = scmp.eq.s32.totalorder %s46, 0
    %s49 = sadd.s32 %s48, 1
    %s50 = scalar_select %p47, %s48, %s49
    %p53 = pneg %p47
    %p54 = scmp.eq.s32.totalorder %s11, 1
    %p55 = por %p53, %p54
    %p56 = scmp.ne.s32.totalorder %s48, %s51
    %p57 = scmp.eq.s32.totalorder %s11, 0
    %p58 = por %p56, %p57
    %p59 = scmp.ne.s32.totalorder %s48, %s51
    %p60 = scmp.eq.s32.totalorder %s16, 1
    %p61 = por %p59, %p60
    %p62 = scmp.ne.s32.totalorder %s51, %s52
    %p63 = scmp.eq.s32.totalorder %s16, 0
    %p64 = por %p62, %p63
    %p65 = scmp.ne.s32.totalorder %s51, %s52
    %p66 = scmp.eq.s32.totalorder %s17, 1
    %p67 = por %p65, %p66
    %p69 = scmp.ne.s32.totalorder %s52, %s68
    %p70 = scmp.eq.s32.totalorder %s17, 0
    %p71 = por %p69, %p70
    %s72 = sadd.s32 %s18, %s20
    %p73 = scmp.lt.s32.totalorder %s72, 0
    %s74 = scalar_select %p73, %s72, 0
    %s75 = sadd.s32 %s37, %s29
    %p76 = scmp.lt.s32.totalorder %s75, 0
    %s77 = scalar_select %p76, %s75, 0
    %s78 = ssub.s32 %s19, %s33
    %s79 = ssub.s32 %s74, %s77
    %s80 = sor.u32 %s78, %s79
    %p81 = scmp.eq.s32.totalorder %s80, 0
    %s83 = sadd.s32 %s82, 1
    %s84 = scalar_select %p81, %s82, %s83
    %p87 = pneg %p81
    %p88 = scmp.eq.s32.totalorder %s11, 1
    %p89 = por %p87, %p88
    %p90 = scmp.ne.s32.totalorder %s82, %s85
    %p91 = scmp.eq.s32.totalorder %s11, 0
    %p92 = por %p90, %p91
    %p93 = scmp.ne.s32.totalorder %s82, %s85
    %p94 = scmp.eq.s32.totalorder %s16, 1
    %p95 = por %p93, %p94
    %p96 = scmp.ne.s32.totalorder %s85, %s86
    %p97 = scmp.eq.s32.totalorder %s16, 0
    %p98 = por %p96, %p97
    %p99 = scmp.ne.s32.totalorder %s85, %s86
    %p100 = scmp.eq.s32.totalorder %s17, 1
    %p101 = por %p99, %p100
    %p103 = scmp.ne.s32.totalorder %s86, %s102
    %p104 = scmp.eq.s32.totalorder %s17, 0
    %p105 = por %p103, %p104
    %s106 = ssub.s32 %s18, %s37
    %s107 = ssub.s32 %s19, %s33
    %s108 = sor.u32 %s106, %s107
    %p109 = scmp.eq.s32.totalorder %s108, 0
    %s111 = sadd.s32 %s110, 1
    %s112 = scalar_select %p109, %s110, %s111
    %p115 = pneg %p109
    %p116 = scmp.eq.s32.totalorder %s11, 1
    %p117 = por %p115, %p116
    %p118 = scmp.ne.s32.totalorder %s110, %s113
    %p119 = scmp.eq.s32.totalorder %s11, 0
    %p120 = por %p118, %p119
    %p121 = scmp.ne.s32.totalorder %s110, %s113
    %p122 = scmp.eq.s32.totalorder %s16, 1
    %p123 = por %p121, %p122
    %p124 = scmp.ne.s32.totalorder %s113, %s114
    %p125 = scmp.eq.s32.totalorder %s16, 0
    %p126 = por %p124, %p125
    %p127 = scmp.ne.s32.totalorder %s113, %s114
    %p128 = scmp.eq.s32.totalorder %s17, 1
    %p129 = por %p127, %p128
    %p131 = scmp.ne.s32.totalorder %s114, %s130
    %p132 = scmp.eq.s32.totalorder %s17, 0
    %p133 = por %p131, %p132
    %s134 = ssub.s32 %s18, %s37
    %s135 = ssub.s32 %s19, %s33
    %s136 = sor.u32 %s134, %s135
    %p137 = scmp.eq.s32.totalorder %s136, 0
    %s139 = sadd.s32 %s138, 1
    %s140 = scalar_select %p137, %s138, %s139
    %p143 = pneg %p137
    %p144 = scmp.eq.s32.totalorder %s11, 1
    %p145 = por %p143, %p144
    %p146 = scmp.ne.s32.totalorder %s138, %s141
    %p147 = scmp.eq.s32.totalorder %s11, 0
    %p148 = por %p146, %p147
    %p149 = scmp.ne.s32.totalorder %s138, %s141
    %p150 = scmp.eq.s32.totalorder %s16, 1
    %p151 = por %p149, %p150
    %p152 = scmp.ne.s32.totalorder %s141, %s142
    %p153 = scmp.eq.s32.totalorder %s16, 0
    %p154 = por %p152, %p153
    %p155 = scmp.ne.s32.totalorder %s141, %s142
    %p156 = scmp.eq.s32.totalorder %s17, 1
    %p157 = por %p155, %p156
    %p159 = scmp.ne.s32.totalorder %s142, %s158
    %p160 = scmp.eq.s32.totalorder %s17, 0
    %p161 = por %p159, %p160
    %s162 = ssub.s32 %s18, %s37
    %s163 = ssub.s32 %s19, %s33
    %s164 = sor.u32 %s162, %s163
    %p165 = scmp.eq.s32.totalorder %s164, 0
    %s167 = sadd.s32 %s166, 1
    %s168 = scalar_select %p165, %s166, %s167
    %p171 = pneg %p165
    %p172 = scmp.eq.s32.totalorder %s11, 1
    %p173 = por %p171, %p172
    %p174 = scmp.ne.s32.totalorder %s166, %s169
    %p175 = scmp.eq.s32.totalorder %s11, 0
    %p176 = por %p174, %p175
    %p177 = scmp.ne.s32.totalorder %s166, %s169
    %p178 = scmp.eq.s32.totalorder %s16, 1
    %p179 = por %p177, %p178
    %p180 = scmp.ne.s32.totalorder %s169, %s170
    %p181 = scmp.eq.s32.totalorder %s16, 0
    %p182 = por %p180, %p181
    %p183 = scmp.ne.s32.totalorder %s169, %s170
    %p184 = scmp.eq.s32.totalorder %s17, 1
    %p185 = por %p183, %p184
    %p187 = scmp.ne.s32.totalorder %s170, %s186
    %p188 = scmp.eq.s32.totalorder %s17, 0
    %p189 = por %p187, %p188
    %p190 = scmp.le.s32.totalorder 1, %s11
    %p191 = scmp.lt.s32.totalorder %s11, 3
    %p192 = pnand %p190, %p191
    %p193 = pneg %p192
    // Predicated region
    $region9: #{soft_iou_loss.1} parent=5 // pred_check
      _
    $region10: #{soft_iou_loss.1} parent=5 // pred_check_branch
      %195 = sbr.rel (%p192) target = $region12
    $region11: #{soft_iou_loss.1} parent=5 // pred_region
      %s196 = ssub.s32 %s11, 1
    $region12: #{soft_iou_loss.1} parent=5 // pred_fallthru
      _
    %p197 = scmp.lt.s32.totalorder %s11, 2
    // Predicated region
    $region13: #{soft_iou_loss.1} parent=5 // pred_check
      %p198 = pneg %p197
    $region14: #{soft_iou_loss.1} parent=5 // pred_check_branch
      %200 = sbr.rel (%p198) target = $region16
    $region15: #{soft_iou_loss.1} parent=5 // pred_region
      // Predicated region
      $region17: #{soft_iou_loss.1} parent=15 // pred_check
        %p201 = pneg %p58
      $region18: #{soft_iou_loss.1} parent=15 // pred_check_branch
        %203 = sbr.rel (%p201) target = $region20
      $region19: #{soft_iou_loss.1} parent=15 // pred_region
        %s204 = sadd.s32 %s18, %s20
        %p205 = scmp.lt.s32.totalorder %s204, 0
        %s206 = scalar_select %p205, %s204, 0
        %p207 = scmp.lt.s32.totalorder %s19, 1
        %s208 = scalar_select %p207, %s19, 1
        %p209 = scmp.lt.s32.totalorder %s206, 0
        %s210 = scalar_select %p209, %s206, 0
        %s211 = sadd.s32 %s210, %s208
        %s212 = smul.addr %s211, 8
        %s213 = scalar_lea.vmem %s0, %s212
        %s214 = sadd.s32 %s18, %s20
        %p215 = scmp.lt.s32.totalorder %s214, 0
        %s216 = scalar_select %p215, %s214, 0
      $region20: #{soft_iou_loss.1} parent=15 // pred_fallthru
        _
      // Predicated region
      $region21: #{soft_iou_loss.1} parent=15 // pred_check
        %p217 = pneg %p92
      $region22: #{soft_iou_loss.1} parent=15 // pred_check_branch
        %219 = sbr.rel (%p217) target = $region24
      $region23: #{soft_iou_loss.1} parent=15 // pred_region
        %s220 = sadd.s32 %s18, %s20
        %p221 = scmp.lt.s32.totalorder %s220, 0
        %s222 = scalar_select %p221, %s220, 0
        %p223 = scmp.lt.s32.totalorder %s19, 1
        %s224 = scalar_select %p223, %s19, 1
        %p225 = scmp.lt.s32.totalorder %s222, 0
        %s226 = scalar_select %p225, %s222, 0
        %s227 = sadd.s32 %s226, %s224
        %s228 = smul.addr %s227, 2
        %s229 = scalar_lea.vmem %s1, %s228
        %s230 = sadd.s32 %s18, %s20
        %p231 = scmp.lt.s32.totalorder %s230, 0
        %s232 = scalar_select %p231, %s230, 0
      $region24: #{soft_iou_loss.1} parent=15 // pred_fallthru
        _
    $region16: #{soft_iou_loss.1} parent=5 // pred_fallthru
      _
    %p233 = scmp.le.s32.totalorder 1, %s11
    %p234 = scmp.lt.s32.totalorder %s11, 3
    %p235 = pnand %p233, %p234
    %p236 = pneg %p235
    // Predicated region
    $region25: #{soft_iou_loss.1} parent=5 // pred_check
      _
    $region26: #{soft_iou_loss.1} parent=5 // pred_check_branch
      %238 = sbr.rel (%p235) target = $region28
    $region27: #{soft_iou_loss.1} parent=5 // pred_region
      %s239 = ssub.s32 %s11, 1
      %s240 = sadd.s32 %s21, %s23
      %p241 = scmp.lt.s32.totalorder %s240, 0
      %s242 = scalar_select %p241, %s240, 0
      %p243 = scmp.lt.s32.totalorder %s22, 1
      %s244 = scalar_select %p243, %s22, 1
      %p245 = scmp.lt.s32.totalorder %s242, 0
      %s246 = scalar_select %p245, %s242, 0
      %s247 = sadd.s32 %s246, %s244
      %s248 = smul.addr %s247, 8
      %s249 = scalar_lea.vmem %s0, %s248
      %p250 = pneg %p64
      %p251 = pneg %p61
      %s252 = sadd.s32 %s21, %s23
      %p253 = scmp.lt.s32.totalorder %s252, 0
      %s254 = scalar_select %p253, %s252, 0
      %p255 = scmp.lt.s32.totalorder %s22, 1
      %s256 = scalar_select %p255, %s22, 1
      %p257 = scmp.lt.s32.totalorder %s254, 0
      %s258 = scalar_select %p257, %s254, 0
      %s259 = sadd.s32 %s258, %s256
      %s260 = smul.addr %s259, 2
      %s261 = scalar_lea.vmem %s1, %s260
      %p262 = pneg %p98
      %p263 = pneg %p95
      %p264 = pneg %p126
      %p265 = pneg %p123
      %p266 = scmp.lt.s32.totalorder %s21, 0
      %s267 = scalar_select %p266, %s21, 0
      %p268 = scmp.lt.s32.totalorder %s22, 1
      %s269 = scalar_select %p268, %s22, 1
      %s270 = smul.addr %s267, 2
      %s271 = sadd.s32 %s269, %s270
      %s272 = scalar_lea.vmem %s2, %s271
      %p273 = pneg %p154
      %p274 = pneg %p151
      %p275 = scmp.lt.s32.totalorder %s21, 0
      %s276 = scalar_select %p275, %s21, 0
      %p277 = scmp.lt.s32.totalorder %s22, 1
      %s278 = scalar_select %p277, %s22, 1
      %s279 = smul.addr %s276, 2
      %s280 = sadd.s32 %s278, %s279
      %s281 = scalar_lea.vmem %s3, %s280
      %p282 = pneg %p182
      %p283 = pneg %p179
      %p284 = scmp.lt.s32.totalorder %s21, 0
      %s285 = scalar_select %p284, %s21, 0
      %p286 = scmp.lt.s32.totalorder %s22, 1
      %s287 = scalar_select %p286, %s22, 1
      %s288 = smul.addr %s285, 2
      %s289 = sadd.s32 %s287, %s288
      %s290 = scalar_lea.vmem %s4, %s289
      %s291 = sadd.s32 %s21, %s23
      %p292 = scmp.lt.s32.totalorder %s291, 0
      %s293 = scalar_select %p292, %s291, 0
      %p294 = scmp.lt.s32.totalorder %s22, 1
      %s295 = scalar_select %p294, %s22, 1
      %p296 = scmp.lt.s32.totalorder %s293, 0
      %s297 = scalar_select %p296, %s293, 0
      %s298 = sadd.s32 %s297, %s295
      %s299 = smul.addr %s298, 8
      %s300 = scalar_lea.vmem %s0, %s299
      %s301 = sadd.s32 %s21, %s23
      %p302 = scmp.lt.s32.totalorder %s301, 0
      %s303 = scalar_select %p302, %s301, 0
      %s304 = sadd.s32 %s21, %s23
      %p305 = scmp.lt.s32.totalorder %s304, 0
      %s306 = scalar_select %p305, %s304, 0
      %p307 = scmp.lt.s32.totalorder %s22, 1
      %s308 = scalar_select %p307, %s22, 1
      %p309 = scmp.lt.s32.totalorder %s306, 0
      %s310 = scalar_select %p309, %s306, 0
      %s311 = sadd.s32 %s310, %s308
      %s312 = smul.addr %s311, 2
      %s313 = scalar_lea.vmem %s1, %s312
      %s314 = sadd.s32 %s21, %s23
      %p315 = scmp.lt.s32.totalorder %s314, 0
      %s316 = scalar_select %p315, %s314, 0
      %p317 = scmp.lt.s32.totalorder %s21, 0
      %s318 = scalar_select %p317, %s21, 0
      %p319 = scmp.lt.s32.totalorder %s22, 1
      %s320 = scalar_select %p319, %s22, 1
      %s321 = smul.addr %s318, 2
      %s322 = sadd.s32 %s320, %s321
      %s323 = scalar_lea.vmem %s2, %s322
      %p324 = scmp.lt.s32.totalorder %s21, 0
      %s325 = scalar_select %p324, %s21, 0
      %p326 = scmp.lt.s32.totalorder %s22, 1
      %s327 = scalar_select %p326, %s22, 1
      %s328 = smul.addr %s325, 2
      %s329 = sadd.s32 %s327, %s328
      %s330 = scalar_lea.vmem %s3, %s329
      %p331 = scmp.lt.s32.totalorder %s21, 0
      %s332 = scalar_select %p331, %s21, 0
      %p333 = scmp.lt.s32.totalorder %s22, 1
      %s334 = scalar_select %p333, %s22, 1
      %s335 = smul.addr %s332, 2
      %s336 = sadd.s32 %s334, %s335
      %s337 = scalar_lea.vmem %s4, %s336
      %p338 = scmp.eq.s32.totalorder %s23, 0
      // Predicated region
      $region29: #{soft_iou_loss.1} parent=27 // pred_check
        %p339 = pneg %p338
      $region30: #{soft_iou_loss.1} parent=27 // pred_check_branch
        %341 = sbr.rel (%p339) target = $region32
      $region31: #{soft_iou_loss.1} parent=27 // pred_region
        %342 = vst [vmem:[%s323] sm:$0x1] 0.0
        %343 = vst [vmem:[%s330] sm:$0x1] 0.0
        %344 = vst [vmem:[%s337] sm:$0x1] 0.0
      $region32: #{soft_iou_loss.1} parent=27 // pred_fallthru
        _
      %v345 = vld [vmem:[%s300] sm:$0xff]
      %v346 = vxor.u32 %v345, 2147483648
      %v347 = vmul.f32 %v346, 1.442695
      %v348 = vpow.pop %v347
      %v349 = vadd.f32 %v348, 1.0
      %v350 = vrcp.pop %v349
      %v351 = vmul.f32 1.0, %v350
      %v352 = vld [vmem:[%s313] sm:$0x3]
      %v353 = vunpack.c.0.s8 %v352
      %v354 = vcvt.s32.f32 %v353
      %v355 = vld [vmem:[%s323] sm:$0x1]
      %v356 = vmul.f32 %v351, %v354
      %v357 = vrot.slane %v356, 4
      %v358 = vadd.f32 %v356, %v357
      %v359 = vrot.slane %v358, 2
      %v360 = vadd.f32 %v358, %v359
      %v361 = vrot.slane %v360, 1
      %v362 = vadd.f32 %v360, %v361
      %v363 = vadd.f32 %v355, %v362
      %364 = vst [vmem:[%s323] sm:$0x1] %v363
      %v365 = vld [vmem:[%s330] sm:$0x1]
      %v366 = vrot.slane %v351, 4
      %v367 = vadd.f32 %v351, %v366
      %v368 = vrot.slane %v367, 2
      %v369 = vadd.f32 %v367, %v368
      %v370 = vrot.slane %v369, 1
      %v371 = vadd.f32 %v369, %v370
      %v372 = vadd.f32 %v365, %v371
      %373 = vst [vmem:[%s330] sm:$0x1] %v372
      %v374 = vld [vmem:[%s337] sm:$0x1]
      %v375 = vrot.slane %v354, 4
      %v376 = vadd.f32 %v354, %v375
      %v377 = vrot.slane %v376, 2
      %v378 = vadd.f32 %v376, %v377
      %v379 = vrot.slane %v378, 1
      %v380 = vadd.f32 %v378, %v379
      %v381 = vadd.f32 %v374, %v380
      %382 = vst [vmem:[%s337] sm:$0x1] %v381
      %p383 = scmp.lt.s32.totalorder %s21, 0
      %s384 = scalar_select %p383, %s21, 0
      %p385 = scmp.lt.s32.totalorder %s22, 1
      %s386 = scalar_select %p385, %s22, 1
      %s387 = smul.addr %s384, 2
      %s388 = sadd.s32 %s386, %s387
      %s389 = scalar_lea.vmem %s2, %s388
      %p390 = scmp.lt.s32.totalorder %s21, 0
      %s391 = scalar_select %p390, %s21, 0
      %p392 = scmp.lt.s32.totalorder %s22, 1
      %s393 = scalar_select %p392, %s22, 1
      %s394 = smul.addr %s391, 2
      %s395 = sadd.s32 %s393, %s394
      %s396 = scalar_lea.vmem %s3, %s395
      %p397 = scmp.lt.s32.totalorder %s21, 0
      %s398 = scalar_select %p397, %s21, 0
      %p399 = scmp.lt.s32.totalorder %s22, 1
      %s400 = scalar_select %p399, %s22, 1
      %s401 = smul.addr %s398, 2
      %s402 = sadd.s32 %s400, %s401
      %s403 = scalar_lea.vmem %s4, %s402
      // Predicated region
      $region33: #{soft_iou_loss.1} parent=27 // pred_check
        %p404 = pneg %p123
      $region34: #{soft_iou_loss.1} parent=27 // pred_check_branch
        %406 = sbr.rel (%p404) target = $region36
      $region35: #{soft_iou_loss.1} parent=27 // pred_region
        _
      $region36: #{soft_iou_loss.1} parent=27 // pred_fallthru
        _
      // Predicated region
      $region37: #{soft_iou_loss.1} parent=27 // pred_check
        %p407 = pneg %p151
      $region38: #{soft_iou_loss.1} parent=27 // pred_check_branch
        %409 = sbr.rel (%p407) target = $region40
      $region39: #{soft_iou_loss.1} parent=27 // pred_region
        _
      $region40: #{soft_iou_loss.1} parent=27 // pred_fallthru
        _
      // Predicated region
      $region41: #{soft_iou_loss.1} parent=27 // pred_check
        %p410 = pneg %p179
      $region42: #{soft_iou_loss.1} parent=27 // pred_check_branch
        %412 = sbr.rel (%p410) target = $region44
      $region43: #{soft_iou_loss.1} parent=27 // pred_region
        _
      $region44: #{soft_iou_loss.1} parent=27 // pred_fallthru
        _
    $region28: #{soft_iou_loss.1} parent=5 // pred_fallthru
      _
    %p413 = scmp.le.s32.totalorder 2, %s11
    // Predicated region
    $region45: #{soft_iou_loss.1} parent=5 // pred_check
      %p414 = pneg %p413
    $region46: #{soft_iou_loss.1} parent=5 // pred_check_branch
      %416 = sbr.rel (%p414) target = $region48
    $region47: #{soft_iou_loss.1} parent=5 // pred_region
      %s417 = ssub.s32 %s11, 2
      // Predicated region
      $region49: #{soft_iou_loss.1} parent=47 // pred_check
        %p418 = pneg %p129
      $region50: #{soft_iou_loss.1} parent=47 // pred_check_branch
        %420 = sbr.rel (%p418) target = $region52
      $region51: #{soft_iou_loss.1} parent=47 // pred_region
        %p421 = scmp.lt.s32.totalorder %s24, 0
        %s422 = scalar_select %p421, %s24, 0
        %p423 = scmp.lt.s32.totalorder %s25, 1
        %s424 = scalar_select %p423, %s25, 1
        %s425 = smul.addr %s422, 2
        %s426 = sadd.s32 %s424, %s425
        %s427 = scalar_lea.vmem %s2, %s426
      $region52: #{soft_iou_loss.1} parent=47 // pred_fallthru
        _
      // Predicated region
      $region53: #{soft_iou_loss.1} parent=47 // pred_check
        %p428 = pneg %p157
      $region54: #{soft_iou_loss.1} parent=47 // pred_check_branch
        %430 = sbr.rel (%p428) target = $region56
      $region55: #{soft_iou_loss.1} parent=47 // pred_region
        %p431 = scmp.lt.s32.totalorder %s24, 0
        %s432 = scalar_select %p431, %s24, 0
        %p433 = scmp.lt.s32.totalorder %s25, 1
        %s434 = scalar_select %p433, %s25, 1
        %s435 = smul.addr %s432, 2
        %s436 = sadd.s32 %s434, %s435
        %s437 = scalar_lea.vmem %s3, %s436
      $region56: #{soft_iou_loss.1} parent=47 // pred_fallthru
        _
      // Predicated region
      $region57: #{soft_iou_loss.1} parent=47 // pred_check
        %p438 = pneg %p185
      $region58: #{soft_iou_loss.1} parent=47 // pred_check_branch
        %440 = sbr.rel (%p438) target = $region60
      $region59: #{soft_iou_loss.1} parent=47 // pred_region
        %p441 = scmp.lt.s32.totalorder %s24, 0
        %s442 = scalar_select %p441, %s24, 0
        %p443 = scmp.lt.s32.totalorder %s25, 1
        %s444 = scalar_select %p443, %s25, 1
        %s445 = smul.addr %s442, 2
        %s446 = sadd.s32 %s444, %s445
        %s447 = scalar_lea.vmem %s4, %s446
      $region60: #{soft_iou_loss.1} parent=47 // pred_fallthru
        _
    $region48: #{soft_iou_loss.1} parent=5 // pred_fallthru
      _
  $region6: #{soft_iou_loss.1} parent=0 // loop_footer
    %s15 = sadd.s32 1, %s11
  $region7: #{soft_iou_loss.1} parent=0 // loop_footer_branch
    %10 = sbr.rel target = $region3
  $region8: #{soft_iou_loss.1} parent=0 // loop_exit
    _

</llo_original>
